<compile_context>
chip_gen: v7x
topology: tpu7x:2x2x1
jax: 0.10.0
libtpu: 0.0.40
codegen_flags: <defaults>
</compile_context>

<pallas_src>
import jax
import jax.numpy as jnp
from jax.experimental import pallas as pl
from jax.experimental.pallas import tpu as pltpu


def attention_layer_kernel(x0_ref, x1_ref, x2_ref, x3_ref,
                           wcat_ref, ws_ref, bias_ref, o_ref):
    # x*_ref:   (tb, F)   per-branch input tiles
    # wcat_ref: (F, 64)   concat(w0..w3) along columns (16 each)
    # ws_ref:   (16, 64)  ls weight
    # bias_ref: (2, 64)   row0 = concat(b0..b3), row1 = (b0+b1+b2+b3)@ws + bs
    bcat = bias_ref[0:1, :]
    b_au = bias_ref[1:2, :]

    x_refs = (x0_ref, x1_ref, x2_ref, x3_ref)

    # Per-branch projections (no structural-zero MACs).
    projs = []
    s = None
    for j, xr in enumerate(x_refs):
        pj = jnp.dot(xr[...], wcat_ref[:, 16 * j:16 * (j + 1)],
                     preferred_element_type=jnp.float32)          # (tb, 16)
        projs.append(pj)
        s = pj if s is None else s + pj

    # Attention logits and numerically-stable softmax over the 64-wide axis.
    au = jnp.dot(s, ws_ref[...], preferred_element_type=jnp.float32) + b_au
    au = au - jnp.max(au, axis=1, keepdims=True)
    e = jnp.exp(au)
    p = e / jnp.sum(e, axis=1, keepdims=True)                     # exact divide

    # out slab j = (Xj@wj + bj) * softmax slab j
    for j in range(4):
        lo, hi = 16 * j, 16 * (j + 1)
        o_ref[:, lo:hi] = ((projs[j] + bcat[:, lo:hi]) * p[:, lo:hi]
                           ).astype(o_ref.dtype)


def _round8_down(n):
    return max(8, (int(n) // 8) * 8)


def attention_layer(x0, x1, x2, x3, params, *, block_b=4096):
    """params: w0..w3 (F,16), b0..b3 (1,16), ws (16,64), bs (1,64). Returns (B,64)."""
    B, F = x0.shape
    N = 64

    # ---- tiny wrapper-side weight/bias folding (negligible HBM traffic) ----
    wcat = jnp.concatenate([params["w0"], params["w1"],
                            params["w2"], params["w3"]], axis=1)   # (F, 64)
    wcat = wcat.astype(jnp.float32)
    ws = params["ws"].astype(jnp.float32)                          # (16, 64)
    bcat = jnp.concatenate([params["b0"], params["b1"],
                            params["b2"], params["b3"]], axis=1)   # (1, 64)
    bsum = (params["b0"] + params["b1"] + params["b2"] + params["b3"])
    b_au = bsum @ ws + params["bs"]                                # (1, 64)
    biases = jnp.concatenate([bcat, b_au], axis=0).astype(jnp.float32)  # (2, 64)

    # ---- generation-aware tile / VMEM sizing ----
    try:
        info = pltpu.get_tpu_info()
        vmem_cap = int(getattr(info, "vmem_capacity_bytes", 64 << 20))
    except Exception:
        vmem_cap = 64 << 20                      # conservative (v7x per-TC)
    budget = (vmem_cap * 45) // 100              # leave headroom for compiler scratch

    resident = (F * N + 16 * N + 2 * N) * 4 * 2              # weights+biases, dbl-buf
    bytes_per_row = (2 * 4 * F + 2 * N + 8 * N) * 4          # X dbl-buf, out dbl-buf, temps
    max_tb_vmem = max(8, (budget - resident) // bytes_per_row)

    tb = min(block_b, B)
    if B >= 16:
        # Keep >=2 grid steps so both v7x TensorCores get work (harmless elsewhere).
        tb = min(tb, _round8_down(pl.cdiv(B, 2)))
    tb = min(tb, max_tb_vmem)
    if tb < B:
        tb = _round8_down(tb)                    # sublane alignment for partial-dim blocks

    grid = (pl.cdiv(B, tb),)                     # partial last block handled by Pallas

    need = resident + tb * bytes_per_row
    vmem_limit = int(min(max(2 * need, 16 << 20), budget))

    cost = pl.CostEstimate(
        flops=2 * B * (4 * F * 16 + 16 * N),
        transcendentals=B * N,
        bytes_accessed=4 * (4 * B * F + B * N + F * N + 16 * N + 2 * N),
    )

    out = pl.pallas_call(
        attention_layer_kernel,
        out_shape=jax.ShapeDtypeStruct((B, N), jnp.float32),
        grid=grid,
        in_specs=[
            pl.BlockSpec((tb, F), lambda i: (i, 0)),   # x0 tile (pipelined)
            pl.BlockSpec((tb, F), lambda i: (i, 0)),   # x1 tile
            pl.BlockSpec((tb, F), lambda i: (i, 0)),   # x2 tile
            pl.BlockSpec((tb, F), lambda i: (i, 0)),   # x3 tile
            pl.BlockSpec((F, N), lambda i: (0, 0)),    # concat branch weights (resident)
            pl.BlockSpec((16, N), lambda i: (0, 0)),   # ws (resident)
            pl.BlockSpec((2, N), lambda i: (0, 0)),    # folded biases (resident)
        ],
        out_specs=pl.BlockSpec((tb, N), lambda i: (i, 0)),
        compiler_params=pltpu.CompilerParams(
            dimension_semantics=("parallel",),
            vmem_limit_bytes=vmem_limit,
        ),
        cost_estimate=cost,
    )(x0, x1, x2, x3, wcat, ws, biases)

    return out


def reference_jax(x0, x1, x2, x3, p):
    """Pure-JAX reference mirroring the PyTorch forward."""
    x0p = x0 @ p["w0"] + p["b0"]
    x1p = x1 @ p["w1"] + p["b1"]
    x2p = x2 @ p["w2"] + p["b2"]
    x3p = x3 @ p["w3"] + p["b3"]
    au = (x0p + x1p + x2p + x3p) @ p["ws"] + p["bs"]
    au = jax.nn.softmax(au, axis=1)
    xcat = jnp.concatenate([x0p, x1p, x2p, x3p], axis=1)
    return xcat * au


def init_params(key, featurelen):
    """Deterministic synthetic parameters (shapes match nn.Linear in __init__)."""
    ks = jax.random.split(key, 10)
    scale_in = 1.0 / jnp.sqrt(featurelen)
    scale_hid = 1.0 / jnp.sqrt(16.0)
    p = {}
    for i in range(4):
        p[f"w{i}"] = jax.random.uniform(
            ks[2 * i], (featurelen, 16), jnp.float32, -scale_in, scale_in)
        p[f"b{i}"] = jax.random.uniform(
            ks[2 * i + 1], (1, 16), jnp.float32, -scale_in, scale_in)
    p["ws"] = jax.random.uniform(ks[8], (16, 64), jnp.float32, -scale_hid, scale_hid)
    p["bs"] = jax.random.uniform(ks[9], (1, 64), jnp.float32, -scale_hid, scale_hid)
    return p


if __name__ == "__main__":
    key = jax.random.PRNGKey(0)
    B, F = 8, 32  # batch=8, featurelen=32
    kx = jax.random.split(key, 5)
    params = init_params(kx[0], F)
    x0 = jax.random.normal(kx[1], (B, F), jnp.float32)
    x1 = jax.random.normal(kx[2], (B, F), jnp.float32)
    x2 = jax.random.normal(kx[3], (B, F), jnp.float32)
    x3 = jax.random.normal(kx[4], (B, F), jnp.float32)

    out = attention_layer(x0, x1, x2, x3, params)
    jax.block_until_ready(out)

    ref = reference_jax(x0, x1, x2, x3, params)
    assert out.shape == (B, 64)
    assert jnp.allclose(out, ref, atol=1e-4, rtol=1e-4)
    print("KERNEL_OK")
</pallas_src>

<mosaic_0001>
module attributes {stable_mosaic.version = 11 : i64} {
  func.func @attention_layer_kernel(%arg0: i32, %arg1: memref<8x32xf32, #tpu.memory_space<vmem>>, %arg2: memref<8x32xf32, #tpu.memory_space<vmem>>, %arg3: memref<8x32xf32, #tpu.memory_space<vmem>>, %arg4: memref<8x32xf32, #tpu.memory_space<vmem>>, %arg5: memref<32x64xf32, #tpu.memory_space<vmem>>, %arg6: memref<16x64xf32, #tpu.memory_space<vmem>>, %arg7: memref<2x64xf32, #tpu.memory_space<vmem>>, %arg8: memref<8x64xf32, #tpu.memory_space<vmem>>) attributes {dimension_semantics = [#tpu.dimension_semantics<parallel>], iteration_bounds = array<i64: 1>, scalar_prefetch = 0 : i64, scratch_operands = 0 : i64, tpu.core_type = #tpu.core_type<tc>, window_params = [{transform_indices = @transform_0, window_bounds = array<i64: 8, 32>}, {transform_indices = @transform_1, window_bounds = array<i64: 8, 32>}, {transform_indices = @transform_2, window_bounds = array<i64: 8, 32>}, {transform_indices = @transform_3, window_bounds = array<i64: 8, 32>}, {pipeline_mode = #tpu.pipeline_mode<synchronous>, transform_indices = @transform_4, window_bounds = array<i64: 32, 64>}, {pipeline_mode = #tpu.pipeline_mode<synchronous>, transform_indices = @transform_5, window_bounds = array<i64: 16, 64>}, {pipeline_mode = #tpu.pipeline_mode<synchronous>, transform_indices = @transform_6, window_bounds = array<i64: 2, 64>}, {transform_indices = @transform_7, window_bounds = array<i64: 8, 64>}]} {
    %c0 = arith.constant 0 : index
    %c0_0 = arith.constant 0 : index
    %0 = vector.load %arg7[%c0, %c0_0] : memref<2x64xf32, #tpu.memory_space<vmem>>, vector<1x64xf32>
    %c1 = arith.constant 1 : index
    %c0_1 = arith.constant 0 : index
    %1 = vector.load %arg7[%c1, %c0_1] : memref<2x64xf32, #tpu.memory_space<vmem>>, vector<1x64xf32>
    %c0_2 = arith.constant 0 : index
    %c0_3 = arith.constant 0 : index
    %2 = vector.load %arg1[%c0_2, %c0_3] : memref<8x32xf32, #tpu.memory_space<vmem>>, vector<8x32xf32>
    %c0_4 = arith.constant 0 : index
    %c0_5 = arith.constant 0 : index
    %3 = vector.load %arg5[%c0_4, %c0_5] : memref<32x64xf32, #tpu.memory_space<vmem>>, vector<32x16xf32>
    %cst = arith.constant dense<0.000000e+00> : vector<8x16xf32>
    %4 = tpu.matmul %2, %3, %cst {dimension_numbers = #tpu.dot_dimension_numbers<[1], [0], [0], [1], [0, 0, 1, 1], [], []>} : vector<8x32xf32>, vector<32x16xf32>, vector<8x16xf32> -> vector<8x16xf32>
    %c0_6 = arith.constant 0 : index
    %c0_7 = arith.constant 0 : index
    %5 = vector.load %arg2[%c0_6, %c0_7] : memref<8x32xf32, #tpu.memory_space<vmem>>, vector<8x32xf32>
    %c0_8 = arith.constant 0 : index
    %c16 = arith.constant 16 : index
    %6 = vector.load %arg5[%c0_8, %c16] : memref<32x64xf32, #tpu.memory_space<vmem>>, vector<32x16xf32>
    %cst_9 = arith.constant dense<0.000000e+00> : vector<8x16xf32>
    %7 = tpu.matmul %5, %6, %cst_9 {dimension_numbers = #tpu.dot_dimension_numbers<[1], [0], [0], [1], [0, 0, 1, 1], [], []>} : vector<8x32xf32>, vector<32x16xf32>, vector<8x16xf32> -> vector<8x16xf32>
    %8 = arith.addf %4, %7 : vector<8x16xf32>
    %c0_10 = arith.constant 0 : index
    %c0_11 = arith.constant 0 : index
    %9 = vector.load %arg3[%c0_10, %c0_11] : memref<8x32xf32, #tpu.memory_space<vmem>>, vector<8x32xf32>
    %c0_12 = arith.constant 0 : index
    %c32 = arith.constant 32 : index
    %10 = vector.load %arg5[%c0_12, %c32] : memref<32x64xf32, #tpu.memory_space<vmem>>, vector<32x16xf32>
    %cst_13 = arith.constant dense<0.000000e+00> : vector<8x16xf32>
    %11 = tpu.matmul %9, %10, %cst_13 {dimension_numbers = #tpu.dot_dimension_numbers<[1], [0], [0], [1], [0, 0, 1, 1], [], []>} : vector<8x32xf32>, vector<32x16xf32>, vector<8x16xf32> -> vector<8x16xf32>
    %12 = arith.addf %8, %11 : vector<8x16xf32>
    %c0_14 = arith.constant 0 : index
    %c0_15 = arith.constant 0 : index
    %13 = vector.load %arg4[%c0_14, %c0_15] : memref<8x32xf32, #tpu.memory_space<vmem>>, vector<8x32xf32>
    %c0_16 = arith.constant 0 : index
    %c48 = arith.constant 48 : index
    %14 = vector.load %arg5[%c0_16, %c48] : memref<32x64xf32, #tpu.memory_space<vmem>>, vector<32x16xf32>
    %cst_17 = arith.constant dense<0.000000e+00> : vector<8x16xf32>
    %15 = tpu.matmul %13, %14, %cst_17 {dimension_numbers = #tpu.dot_dimension_numbers<[1], [0], [0], [1], [0, 0, 1, 1], [], []>} : vector<8x32xf32>, vector<32x16xf32>, vector<8x16xf32> -> vector<8x16xf32>
    %16 = arith.addf %12, %15 : vector<8x16xf32>
    %c0_18 = arith.constant 0 : index
    %c0_19 = arith.constant 0 : index
    %17 = vector.load %arg6[%c0_18, %c0_19] : memref<16x64xf32, #tpu.memory_space<vmem>>, vector<16x64xf32>
    %cst_20 = arith.constant dense<0.000000e+00> : vector<8x64xf32>
    %18 = tpu.matmul %16, %17, %cst_20 {dimension_numbers = #tpu.dot_dimension_numbers<[1], [0], [0], [1], [0, 0, 1, 1], [], []>} : vector<8x16xf32>, vector<16x64xf32>, vector<8x64xf32> -> vector<8x64xf32>
    %19 = vector.broadcast %1 : vector<1x64xf32> to vector<8x64xf32>
    %20 = arith.addf %18, %19 : vector<8x64xf32>
    %cst_21 = arith.constant dense<0xFF800000> : vector<8xf32>
    %21 = vector.multi_reduction <maximumf>, %20, %cst_21 [1] : vector<8x64xf32> to vector<8xf32>
    %22 = vector.shape_cast %21 : vector<8xf32> to vector<8x1xf32>
    %23 = vector.broadcast %22 : vector<8x1xf32> to vector<8x64xf32>
    %24 = arith.subf %20, %23 : vector<8x64xf32>
    %25 = math.exp %24 : vector<8x64xf32>
    %cst_22 = arith.constant dense<0.000000e+00> : vector<8xf32>
    %26 = vector.multi_reduction <add>, %25, %cst_22 [1] : vector<8x64xf32> to vector<8xf32>
    %27 = vector.shape_cast %26 : vector<8xf32> to vector<8x1xf32>
    %28 = vector.broadcast %27 : vector<8x1xf32> to vector<8x64xf32>
    %29 = arith.divf %25, %28 : vector<8x64xf32>
    %30 = vector.extract_strided_slice %0 {offsets = [0, 0], sizes = [1, 16], strides = [1, 1]} : vector<1x64xf32> to vector<1x16xf32>
    %31 = vector.broadcast %30 : vector<1x16xf32> to vector<8x16xf32>
    %32 = arith.addf %4, %31 : vector<8x16xf32>
    %33 = vector.extract_strided_slice %29 {offsets = [0, 0], sizes = [8, 16], strides = [1, 1]} : vector<8x64xf32> to vector<8x16xf32>
    %34 = arith.mulf %32, %33 : vector<8x16xf32>
    %c0_23 = arith.constant 0 : index
    %c0_24 = arith.constant 0 : index
    %35 = vector.load %arg8[%c0_23, %c0_24] : memref<8x64xf32, #tpu.memory_space<vmem>>, vector<8x16xf32>
    tpu.vector_store %arg8[%c0_23, %c0_24], %34 {strides = array<i32>} : memref<8x64xf32, #tpu.memory_space<vmem>>, vector<8x16xf32>,
    %36 = vector.extract_strided_slice %0 {offsets = [0, 16], sizes = [1, 16], strides = [1, 1]} : vector<1x64xf32> to vector<1x16xf32>
    %37 = vector.broadcast %36 : vector<1x16xf32> to vector<8x16xf32>
    %38 = arith.addf %7, %37 : vector<8x16xf32>
    %39 = vector.extract_strided_slice %29 {offsets = [0, 16], sizes = [8, 16], strides = [1, 1]} : vector<8x64xf32> to vector<8x16xf32>
    %40 = arith.mulf %38, %39 : vector<8x16xf32>
    %c0_25 = arith.constant 0 : index
    %c16_26 = arith.constant 16 : index
    %41 = vector.load %arg8[%c0_25, %c16_26] : memref<8x64xf32, #tpu.memory_space<vmem>>, vector<8x16xf32>
    tpu.vector_store %arg8[%c0_25, %c16_26], %40 {strides = array<i32>} : memref<8x64xf32, #tpu.memory_space<vmem>>, vector<8x16xf32>,
    %42 = vector.extract_strided_slice %0 {offsets = [0, 32], sizes = [1, 16], strides = [1, 1]} : vector<1x64xf32> to vector<1x16xf32>
    %43 = vector.broadcast %42 : vector<1x16xf32> to vector<8x16xf32>
    %44 = arith.addf %11, %43 : vector<8x16xf32>
    %45 = vector.extract_strided_slice %29 {offsets = [0, 32], sizes = [8, 16], strides = [1, 1]} : vector<8x64xf32> to vector<8x16xf32>
    %46 = arith.mulf %44, %45 : vector<8x16xf32>
    %c0_27 = arith.constant 0 : index
    %c32_28 = arith.constant 32 : index
    %47 = vector.load %arg8[%c0_27, %c32_28] : memref<8x64xf32, #tpu.memory_space<vmem>>, vector<8x16xf32>
    tpu.vector_store %arg8[%c0_27, %c32_28], %46 {strides = array<i32>} : memref<8x64xf32, #tpu.memory_space<vmem>>, vector<8x16xf32>,
    %48 = vector.extract_strided_slice %0 {offsets = [0, 48], sizes = [1, 16], strides = [1, 1]} : vector<1x64xf32> to vector<1x16xf32>
    %49 = vector.broadcast %48 : vector<1x16xf32> to vector<8x16xf32>
    %50 = arith.addf %15, %49 : vector<8x16xf32>
    %51 = vector.extract_strided_slice %29 {offsets = [0, 48], sizes = [8, 16], strides = [1, 1]} : vector<8x64xf32> to vector<8x16xf32>
    %52 = arith.mulf %50, %51 : vector<8x16xf32>
    %c0_29 = arith.constant 0 : index
    %c48_30 = arith.constant 48 : index
    %53 = vector.load %arg8[%c0_29, %c48_30] : memref<8x64xf32, #tpu.memory_space<vmem>>, vector<8x16xf32>
    tpu.vector_store %arg8[%c0_29, %c48_30], %52 {strides = array<i32>} : memref<8x64xf32, #tpu.memory_space<vmem>>, vector<8x16xf32>,
    return
  }
  func.func @transform_0(%arg0: i32) -> (i32, i32) {
    %c0_i32 = arith.constant 0 : i32
    %c0_i32_0 = arith.constant 0 : i32
    return %arg0, %c0_i32 : i32, i32
  }
  func.func @transform_1(%arg0: i32) -> (i32, i32) {
    %c0_i32 = arith.constant 0 : i32
    %c0_i32_0 = arith.constant 0 : i32
    return %arg0, %c0_i32 : i32, i32
  }
  func.func @transform_2(%arg0: i32) -> (i32, i32) {
    %c0_i32 = arith.constant 0 : i32
    %c0_i32_0 = arith.constant 0 : i32
    return %arg0, %c0_i32 : i32, i32
  }
  func.func @transform_3(%arg0: i32) -> (i32, i32) {
    %c0_i32 = arith.constant 0 : i32
    %c0_i32_0 = arith.constant 0 : i32
    return %arg0, %c0_i32 : i32, i32
  }
  func.func @transform_4(%arg0: i32) -> (i32, i32) {
    %c0_i32 = arith.constant 0 : i32
    %c0_i32_0 = arith.constant 0 : i32
    %c0_i32_1 = arith.constant 0 : i32
    return %c0_i32, %c0_i32_0 : i32, i32
  }
  func.func @transform_5(%arg0: i32) -> (i32, i32) {
    %c0_i32 = arith.constant 0 : i32
    %c0_i32_0 = arith.constant 0 : i32
    %c0_i32_1 = arith.constant 0 : i32
    return %c0_i32, %c0_i32_0 : i32, i32
  }
  func.func @transform_6(%arg0: i32) -> (i32, i32) {
    %c0_i32 = arith.constant 0 : i32
    %c0_i32_0 = arith.constant 0 : i32
    %c0_i32_1 = arith.constant 0 : i32
    return %c0_i32, %c0_i32_0 : i32, i32
  }
  func.func @transform_7(%arg0: i32) -> (i32, i32) {
    %c0_i32 = arith.constant 0 : i32
    %c0_i32_0 = arith.constant 0 : i32
    return %arg0, %c0_i32 : i32, i32
  }
}

</mosaic_0001>

<llo_original>
// kernel: tpu_custom_call.1
$region0: #{tpu_custom_call.1}
  #allocation0 [shape = 'u32[]', space=smem, size = 0x4, offset = 0x4, fixed_abs, tag = 'smem constant byte address 0x4 - core index']
  #allocation1 [shape = 'u32[144,128]{1,0:T(1,128)}', space=vmem, size = 0x12000, scoped, tag = 'internal scratch']
  %s0 = inlined_call_operand.hbm [shape: f32[8,32], index: 0, kind: input, shape index: {}]
  %s1 = inlined_call_operand.hbm [shape: f32[8,32], index: 1, kind: input, shape index: {}]
  %s2 = inlined_call_operand.hbm [shape: f32[8,32], index: 2, kind: input, shape index: {}]
  %s3 = inlined_call_operand.hbm [shape: f32[8,32], index: 3, kind: input, shape index: {}]
  %s4 = inlined_call_operand.hbm [shape: f32[32,64], index: 4, kind: input, shape index: {}]
  %s5 = inlined_call_operand.vmem [shape: f32[16,64], index: 5, kind: input, shape index: {}]
  %s6 = inlined_call_operand.vmem [shape: f32[2,64], index: 6, kind: input, shape index: {}]
  %s7 = inlined_call_operand.hbm [shape: f32[8,64], index: 7, kind: output, shape index: {}]
  %s8 = sld [smem:[#allocation0]]
  $region58: #{tpu_custom_call.1} parent=0
    _
  %s10 = ssub.s32 1, %s8
  %s11 = scalar_select 0, %s10, %s8
  $region1: #{tpu_custom_call.1} parent=0
    #allocation2 [shape = 'u8[4096]{0}', space=vmem, size = 0x1000, scoped, tag = 'input window, operand 0, single buffered']
    #allocation3 [shape = 's32[1]{0}', space=sflag, size = 0x4, scoped, tag = 'scoped memory for tpu_custom_call.1']
    #allocation4 [shape = 's32[1]{0}', space=sflag, size = 0x4, scoped, tag = 'scoped memory for tpu_custom_call.1']
    #allocation5 [shape = 'u8[4096]{0}', space=vmem, size = 0x1000, scoped, tag = 'input window, operand 1, single buffered']
    #allocation6 [shape = 's32[1]{0}', space=sflag, size = 0x4, scoped, tag = 'scoped memory for tpu_custom_call.1']
    #allocation7 [shape = 'u8[4096]{0}', space=vmem, size = 0x1000, scoped, tag = 'input window, operand 2, single buffered']
    #allocation8 [shape = 'u8[4096]{0}', space=vmem, size = 0x1000, scoped, tag = 'input window, operand 3, single buffered']
    #allocation9 [shape = 's32[1]{0}', space=sflag, size = 0x4, scoped, tag = 'scoped memory for tpu_custom_call.1']
    #allocation10 [shape = 'u8[16384]{0}', space=vmem, size = 0x4000, scoped, tag = 'input window, operand 4, single buffered']
    #allocation11 [shape = 'u8[4096]{0}', space=vmem, size = 0x1000, scoped, tag = 'output window, operand 0, single buffered']
    %12 = vsyncpa [#allocation3], 0
    %13 = vsyncpa [#allocation6], 0
    %14 = vsyncpa [#allocation9], 0
    %15 = vsyncpa [#allocation4], 0
    // Predicated region
    $region2: #{tpu_custom_call.1} parent=1 // pred_check
      _
    $region3: #{tpu_custom_call.1} parent=1 // pred_check_branch
      %17 = sbr.rel (0) target = $region5
    $region4: #{tpu_custom_call.1} parent=1 // pred_region
      %s19 = ssub.s32 128, 128
      %20 = vsyncadd [#allocation3], %s19
      %s22 = sshll.u32 [#allocation2], 4
      %s23 = int_to_ptr.vmem [resolvable:$true] %s22
      %25 = dma.hbm_to_vmem [thread:$0]  %s0, 128, %s23, [#allocation3]
    $region5: #{tpu_custom_call.1} parent=1 // pred_fallthru
      _
    // Predicated region
    $region6: #{tpu_custom_call.1} parent=1 // pred_check
      _
    $region7: #{tpu_custom_call.1} parent=1 // pred_check_branch
      %27 = sbr.rel (0) target = $region9
    $region8: #{tpu_custom_call.1} parent=1 // pred_region
      %s29 = ssub.s32 128, 128
      %30 = vsyncadd [#allocation6], %s29
      %s32 = sshll.u32 [#allocation5], 4
      %s33 = int_to_ptr.vmem [resolvable:$true] %s32
      %35 = dma.hbm_to_vmem [thread:$0]  %s1, 128, %s33, [#allocation6]
    $region9: #{tpu_custom_call.1} parent=1 // pred_fallthru
      _
    // Predicated region
    $region10: #{tpu_custom_call.1} parent=1 // pred_check
      _
    $region11: #{tpu_custom_call.1} parent=1 // pred_check_branch
      %37 = sbr.rel (0) target = $region13
    $region12: #{tpu_custom_call.1} parent=1 // pred_region
      %s39 = ssub.s32 128, 128
      %40 = vsyncadd [#allocation6], %s39
      %s42 = sshll.u32 [#allocation7], 4
      %s43 = int_to_ptr.vmem [resolvable:$true] %s42
      %45 = dma.hbm_to_vmem [thread:$0]  %s2, 128, %s43, [#allocation6]
    $region13: #{tpu_custom_call.1} parent=1 // pred_fallthru
      _
    // Predicated region
    $region14: #{tpu_custom_call.1} parent=1 // pred_check
      _
    $region15: #{tpu_custom_call.1} parent=1 // pred_check_branch
      %47 = sbr.rel (0) target = $region17
    $region16: #{tpu_custom_call.1} parent=1 // pred_region
      %s49 = ssub.s32 128, 128
      %50 = vsyncadd [#allocation9], %s49
      %s52 = sshll.u32 [#allocation8], 4
      %s53 = int_to_ptr.vmem [resolvable:$true] %s52
      %55 = dma.hbm_to_vmem [thread:$0]  %s3, 128, %s53, [#allocation9]
    $region17: #{tpu_custom_call.1} parent=1 // pred_fallthru
      _
    // Predicated region
    $region18: #{tpu_custom_call.1} parent=1 // pred_check
      _
    $region19: #{tpu_custom_call.1} parent=1 // pred_check_branch
      %57 = sbr.rel (0) target = $region21
    $region20: #{tpu_custom_call.1} parent=1 // pred_region
      %s59 = ssub.s32 512, 512
      %60 = vsyncadd [#allocation9], %s59
      %s61 = sshll.u32 [#allocation10], 4
      %s62 = int_to_ptr.vmem [resolvable:$true] %s61
      %67 = dma.hbm_to_vmem [thread:$0]  %s4, 512, %s62, [#allocation9], 128, 128, 8
    $region21: #{tpu_custom_call.1} parent=1 // pred_fallthru
      _
    // Predicated region
    $region22: #{tpu_custom_call.1} parent=1 // pred_check
      _
    $region23: #{tpu_custom_call.1} parent=1 // pred_check_branch
      %69 = sbr.rel (0) target = $region25
    $region24: #{tpu_custom_call.1} parent=1 // pred_region
      _
    $region25: #{tpu_custom_call.1} parent=1 // pred_fallthru
      _
    // Predicated region
    $region26: #{tpu_custom_call.1} parent=1 // pred_check
      _
    $region27: #{tpu_custom_call.1} parent=1 // pred_check_branch
      %71 = sbr.rel (0) target = $region29
    $region28: #{tpu_custom_call.1} parent=1 // pred_region
      _
    $region29: #{tpu_custom_call.1} parent=1 // pred_fallthru
      _
    // Predicated region
    $region30: #{tpu_custom_call.1} parent=1 // pred_check
      _
    $region31: #{tpu_custom_call.1} parent=1 // pred_check_branch
      %73 = sbr.rel (0) target = $region33
    $region32: #{tpu_custom_call.1} parent=1 // pred_region
      %74 = dma.done [#allocation3], 128
    $region33: #{tpu_custom_call.1} parent=1 // pred_fallthru
      _
    // Predicated region
    $region34: #{tpu_custom_call.1} parent=1 // pred_check
      _
    $region35: #{tpu_custom_call.1} parent=1 // pred_check_branch
      %76 = sbr.rel (0) target = $region37
    $region36: #{tpu_custom_call.1} parent=1 // pred_region
      %77 = dma.done [#allocation6], 128
    $region37: #{tpu_custom_call.1} parent=1 // pred_fallthru
      _
    // Predicated region
    $region38: #{tpu_custom_call.1} parent=1 // pred_check
      _
    $region39: #{tpu_custom_call.1} parent=1 // pred_check_branch
      %79 = sbr.rel (0) target = $region41
    $region40: #{tpu_custom_call.1} parent=1 // pred_region
      %80 = dma.done [#allocation6], 128
    $region41: #{tpu_custom_call.1} parent=1 // pred_fallthru
      _
    // Predicated region
    $region42: #{tpu_custom_call.1} parent=1 // pred_check
      _
    $region43: #{tpu_custom_call.1} parent=1 // pred_check_branch
      %82 = sbr.rel (0) target = $region45
    $region44: #{tpu_custom_call.1} parent=1 // pred_region
      %83 = dma.done [#allocation9], 128
    $region45: #{tpu_custom_call.1} parent=1 // pred_fallthru
      _
    // Predicated region
    $region46: #{tpu_custom_call.1} parent=1 // pred_check
      _
    $region47: #{tpu_custom_call.1} parent=1 // pred_check_branch
      %85 = sbr.rel (0) target = $region49
    $region48: #{tpu_custom_call.1} parent=1 // pred_region
      %86 = dma.done [#allocation9], 512
    $region49: #{tpu_custom_call.1} parent=1 // pred_fallthru
      _
    %v87 = vld [vmem:[%s6] sm:$0x1]
    %v88 = vld [vmem:[%s6 + $0x1] sm:$0x1]
    %v89 = vld [vmem:[#allocation2] sm:$0xff]
    %v90 = vld [vmem:[#allocation10] sm:$0xff]
    %v91 = vld [vmem:[#allocation10 + $0x8] sm:$0xff]
    %v92 = vld [vmem:[#allocation10 + $0x10] sm:$0xff]
    %v93 = vld [vmem:[#allocation10 + $0x18] sm:$0xff]
    %vm94 = vcmask 261120
    %v96 = vsel %vm94, %v89, 0
    %98 = vmatprep.subr.mxu0 0.0
    %99 = vmatpush1.msra.mxu0 %v90
    %100 = vmatprep.subr.mxu0 0.0
    %101 = vmatpush1.msra.mxu0 %v91
    %102 = vmatprep.subr.mxu0 0.0
    %103 = vmatpush1.msra.mxu0 %v92
    %104 = vmatprep.subr.mxu0 0.0
    %105 = vmatpush1.msra.mxu0 %v93
    %106 = vmatprep.subr.mxu0 0.0
    %107 = vmatpush1.msra.mxu0 0.0
    %108 = vmatprep.subr.mxu0 0.0
    %109 = vmatpush1.msra.mxu0 0.0
    %110 = vmatprep.subr.mxu0 0.0
    %111 = vmatpush1.msra.mxu0 0.0
    %112 = vmatprep.subr.mxu0 0.0
    %113 = vmatpush1.msra.mxu0 0.0
    %114 = vmatprep.subr.mxu0 0.0
    %115 = vmatpush1.msra.mxu0 0.0
    %116 = vmatprep.subr.mxu0 0.0
    %117 = vmatpush1.msra.mxu0 0.0
    %118 = vmatprep.subr.mxu0 0.0
    %119 = vmatpush1.msra.mxu0 0.0
    %120 = vmatprep.subr.mxu0 0.0
    %121 = vmatpush1.msra.mxu0 0.0
    %122 = vmatprep.subr.mxu0 0.0
    %123 = vmatpush1.msra.mxu0 0.0
    %124 = vmatprep.subr.mxu0 0.0
    %125 = vmatpush1.msra.mxu0 0.0
    %126 = vmatprep.subr.mxu0 0.0
    %127 = vmatpush1.msra.mxu0 0.0
    %128 = vmatprep.subr.mxu0 0.0
    %129 = vmatpush1.msra.mxu0 0.0
    %130 = vmatprep.subr.mxu0 0.0
    %131 = vmatpush1.msra.mxu0 0.0
    %132 = vmatprep.subr.mxu0 0.0
    %133 = vmatpush1.msra.mxu0 0.0
    %134 = vmatprep.subr.mxu0 0.0
    %135 = vmatpush1.msra.mxu0 0.0
    %136 = vmatprep.subr.mxu0 0.0
    %137 = vmatpush1.msra.mxu0 0.0
    %138 = vmatprep.subr.mxu0 0.0
    %139 = vmatpush1.msra.mxu0 0.0
    %140 = vmatprep.subr.mxu0 0.0
    %141 = vmatpush1.msra.mxu0 0.0
    %142 = vmatprep.subr.mxu0 0.0
    %143 = vmatpush1.msra.mxu0 0.0
    %144 = vmatprep.subr.mxu0 0.0
    %145 = vmatpush1.msra.mxu0 0.0
    %146 = vmatprep.subr.mxu0 0.0
    %147 = vmatpush1.msra.mxu0 0.0
    %148 = vmatprep.subr.mxu0 0.0
    %149 = vmatpush1.msra.mxu0 0.0
    %150 = vmatprep.subr.mxu0 0.0
    %151 = vmatpush1.msra.mxu0 0.0
    %152 = vmatprep.subr.mxu0 0.0
    %153 = vmatpush1.msra.mxu0 0.0
    %154 = vmatprep.subr.mxu0 0.0
    %155 = vmatpush1.msra.mxu0 0.0
    %156 = vmatprep.subr.mxu0 0.0
    %157 = vmatpush1.msra.mxu0 0.0
    %158 = vmatprep.subr.mxu0 0.0
    %159 = vmatpush1.msra.mxu0 0.0
    %160 = vmatprep.subr.mxu0 0.0
    %161 = vmatpush1.msra.mxu0 0.0
    %162 = vmatprep.mubr.f32.mxu0 0.0
    %163 = vmatmul.mubr.f32.gmra.mrb[0].mxu0 %v96
    %v164 = vpop.f32.mrb[0].mxu0
    %v165 = vadd.f32 0.0, %v164
    %v166 = vpop.f32.mrb[0].mxu0
    %167 = vdwg.mxu0
    %v168 = vld [vmem:[#allocation5] sm:$0xff]
    %173 = vrot.lane.b32.xlu0 %v90, 112
    %v174 = vpop.permute.xlu0 %173
    %175 = vrot.lane.b32.xlu0 %v91, 112
    %v176 = vpop.permute.xlu0 %175
    %177 = vrot.lane.b32.xlu0 %v92, 112
    %v178 = vpop.permute.xlu0 %177
    %179 = vrot.lane.b32.xlu0 %v93, 112
    %v180 = vpop.permute.xlu0 %179
    %v186 = vsel %vm94, %v168, 0
    %188 = vmatprep.subr.mxu0 0.0
    %189 = vmatpush1.msra.mxu0 %v174
    %190 = vmatprep.subr.mxu0 0.0
    %191 = vmatpush1.msra.mxu0 %v176
    %192 = vmatprep.subr.mxu0 0.0
    %193 = vmatpush1.msra.mxu0 %v178
    %194 = vmatprep.subr.mxu0 0.0
    %195 = vmatpush1.msra.mxu0 %v180
    %196 = vmatprep.subr.mxu0 0.0
    %197 = vmatpush1.msra.mxu0 0.0
    %198 = vmatprep.subr.mxu0 0.0
    %199 = vmatpush1.msra.mxu0 0.0
    %200 = vmatprep.subr.mxu0 0.0
    %201 = vmatpush1.msra.mxu0 0.0
    %202 = vmatprep.subr.mxu0 0.0
    %203 = vmatpush1.msra.mxu0 0.0
    %204 = vmatprep.subr.mxu0 0.0
    %205 = vmatpush1.msra.mxu0 0.0
    %206 = vmatprep.subr.mxu0 0.0
    %207 = vmatpush1.msra.mxu0 0.0
    %208 = vmatprep.subr.mxu0 0.0
    %209 = vmatpush1.msra.mxu0 0.0
    %210 = vmatprep.subr.mxu0 0.0
    %211 = vmatpush1.msra.mxu0 0.0
    %212 = vmatprep.subr.mxu0 0.0
    %213 = vmatpush1.msra.mxu0 0.0
    %214 = vmatprep.subr.mxu0 0.0
    %215 = vmatpush1.msra.mxu0 0.0
    %216 = vmatprep.subr.mxu0 0.0
    %217 = vmatpush1.msra.mxu0 0.0
    %218 = vmatprep.subr.mxu0 0.0
    %219 = vmatpush1.msra.mxu0 0.0
    %220 = vmatprep.subr.mxu0 0.0
    %221 = vmatpush1.msra.mxu0 0.0
    %222 = vmatprep.subr.mxu0 0.0
    %223 = vmatpush1.msra.mxu0 0.0
    %224 = vmatprep.subr.mxu0 0.0
    %225 = vmatpush1.msra.mxu0 0.0
    %226 = vmatprep.subr.mxu0 0.0
    %227 = vmatpush1.msra.mxu0 0.0
    %228 = vmatprep.subr.mxu0 0.0
    %229 = vmatpush1.msra.mxu0 0.0
    %230 = vmatprep.subr.mxu0 0.0
    %231 = vmatpush1.msra.mxu0 0.0
    %232 = vmatprep.subr.mxu0 0.0
    %233 = vmatpush1.msra.mxu0 0.0
    %234 = vmatprep.subr.mxu0 0.0
    %235 = vmatpush1.msra.mxu0 0.0
    %236 = vmatprep.subr.mxu0 0.0
    %237 = vmatpush1.msra.mxu0 0.0
    %238 = vmatprep.subr.mxu0 0.0
    %239 = vmatpush1.msra.mxu0 0.0
    %240 = vmatprep.subr.mxu0 0.0
    %241 = vmatpush1.msra.mxu0 0.0
    %242 = vmatprep.subr.mxu0 0.0
    %243 = vmatpush1.msra.mxu0 0.0
    %244 = vmatprep.subr.mxu0 0.0
    %245 = vmatpush1.msra.mxu0 0.0
    %246 = vmatprep.subr.mxu0 0.0
    %247 = vmatpush1.msra.mxu0 0.0
    %248 = vmatprep.subr.mxu0 0.0
    %249 = vmatpush1.msra.mxu0 0.0
    %250 = vmatprep.subr.mxu0 0.0
    %251 = vmatpush1.msra.mxu0 0.0
    %252 = vmatprep.mubr.f32.mxu0 0.0
    %253 = vmatmul.mubr.f32.gmra.mrb[0].mxu0 %v186
    %v254 = vpop.f32.mrb[0].mxu0
    %v255 = vadd.f32 0.0, %v254
    %v256 = vpop.f32.mrb[0].mxu0
    %257 = vdwg.mxu0
    %v258 = vadd.f32 %v165, %v255
    %v259 = vld [vmem:[#allocation7] sm:$0xff]
    %260 = vrot.lane.b32.xlu0 %v90, 96
    %v261 = vpop.permute.xlu0 %260
    %262 = vrot.lane.b32.xlu0 %v91, 96
    %v263 = vpop.permute.xlu0 %262
    %264 = vrot.lane.b32.xlu0 %v92, 96
    %v265 = vpop.permute.xlu0 %264
    %266 = vrot.lane.b32.xlu0 %v93, 96
    %v267 = vpop.permute.xlu0 %266
    %v273 = vsel %vm94, %v259, 0
    %275 = vmatprep.subr.mxu0 0.0
    %276 = vmatpush1.msra.mxu0 %v261
    %277 = vmatprep.subr.mxu0 0.0
    %278 = vmatpush1.msra.mxu0 %v263
    %279 = vmatprep.subr.mxu0 0.0
    %280 = vmatpush1.msra.mxu0 %v265
    %281 = vmatprep.subr.mxu0 0.0
    %282 = vmatpush1.msra.mxu0 %v267
    %283 = vmatprep.subr.mxu0 0.0
    %284 = vmatpush1.msra.mxu0 0.0
    %285 = vmatprep.subr.mxu0 0.0
    %286 = vmatpush1.msra.mxu0 0.0
    %287 = vmatprep.subr.mxu0 0.0
    %288 = vmatpush1.msra.mxu0 0.0
    %289 = vmatprep.subr.mxu0 0.0
    %290 = vmatpush1.msra.mxu0 0.0
    %291 = vmatprep.subr.mxu0 0.0
    %292 = vmatpush1.msra.mxu0 0.0
    %293 = vmatprep.subr.mxu0 0.0
    %294 = vmatpush1.msra.mxu0 0.0
    %295 = vmatprep.subr.mxu0 0.0
    %296 = vmatpush1.msra.mxu0 0.0
    %297 = vmatprep.subr.mxu0 0.0
    %298 = vmatpush1.msra.mxu0 0.0
    %299 = vmatprep.subr.mxu0 0.0
    %300 = vmatpush1.msra.mxu0 0.0
    %301 = vmatprep.subr.mxu0 0.0
    %302 = vmatpush1.msra.mxu0 0.0
    %303 = vmatprep.subr.mxu0 0.0
    %304 = vmatpush1.msra.mxu0 0.0
    %305 = vmatprep.subr.mxu0 0.0
    %306 = vmatpush1.msra.mxu0 0.0
    %307 = vmatprep.subr.mxu0 0.0
    %308 = vmatpush1.msra.mxu0 0.0
    %309 = vmatprep.subr.mxu0 0.0
    %310 = vmatpush1.msra.mxu0 0.0
    %311 = vmatprep.subr.mxu0 0.0
    %312 = vmatpush1.msra.mxu0 0.0
    %313 = vmatprep.subr.mxu0 0.0
    %314 = vmatpush1.msra.mxu0 0.0
    %315 = vmatprep.subr.mxu0 0.0
    %316 = vmatpush1.msra.mxu0 0.0
    %317 = vmatprep.subr.mxu0 0.0
    %318 = vmatpush1.msra.mxu0 0.0
    %319 = vmatprep.subr.mxu0 0.0
    %320 = vmatpush1.msra.mxu0 0.0
    %321 = vmatprep.subr.mxu0 0.0
    %322 = vmatpush1.msra.mxu0 0.0
    %323 = vmatprep.subr.mxu0 0.0
    %324 = vmatpush1.msra.mxu0 0.0
    %325 = vmatprep.subr.mxu0 0.0
    %326 = vmatpush1.msra.mxu0 0.0
    %327 = vmatprep.subr.mxu0 0.0
    %328 = vmatpush1.msra.mxu0 0.0
    %329 = vmatprep.subr.mxu0 0.0
    %330 = vmatpush1.msra.mxu0 0.0
    %331 = vmatprep.subr.mxu0 0.0
    %332 = vmatpush1.msra.mxu0 0.0
    %333 = vmatprep.subr.mxu0 0.0
    %334 = vmatpush1.msra.mxu0 0.0
    %335 = vmatprep.subr.mxu0 0.0
    %336 = vmatpush1.msra.mxu0 0.0
    %337 = vmatprep.subr.mxu0 0.0
    %338 = vmatpush1.msra.mxu0 0.0
    %339 = vmatprep.mubr.f32.mxu0 0.0
    %340 = vmatmul.mubr.f32.gmra.mrb[0].mxu0 %v273
    %v341 = vpop.f32.mrb[0].mxu0
    %v342 = vadd.f32 0.0, %v341
    %v343 = vpop.f32.mrb[0].mxu0
    %344 = vdwg.mxu0
    %v345 = vadd.f32 %v258, %v342
    %v346 = vld [vmem:[#allocation8] sm:$0xff]
    %347 = vrot.lane.b32.xlu0 %v90, 80
    %v348 = vpop.permute.xlu0 %347
    %349 = vrot.lane.b32.xlu0 %v91, 80
    %v350 = vpop.permute.xlu0 %349
    %351 = vrot.lane.b32.xlu0 %v92, 80
    %v352 = vpop.permute.xlu0 %351
    %353 = vrot.lane.b32.xlu0 %v93, 80
    %v354 = vpop.permute.xlu0 %353
    %v360 = vsel %vm94, %v346, 0
    %362 = vmatprep.subr.mxu0 0.0
    %363 = vmatpush1.msra.mxu0 %v348
    %364 = vmatprep.subr.mxu0 0.0
    %365 = vmatpush1.msra.mxu0 %v350
    %366 = vmatprep.subr.mxu0 0.0
    %367 = vmatpush1.msra.mxu0 %v352
    %368 = vmatprep.subr.mxu0 0.0
    %369 = vmatpush1.msra.mxu0 %v354
    %370 = vmatprep.subr.mxu0 0.0
    %371 = vmatpush1.msra.mxu0 0.0
    %372 = vmatprep.subr.mxu0 0.0
    %373 = vmatpush1.msra.mxu0 0.0
    %374 = vmatprep.subr.mxu0 0.0
    %375 = vmatpush1.msra.mxu0 0.0
    %376 = vmatprep.subr.mxu0 0.0
    %377 = vmatpush1.msra.mxu0 0.0
    %378 = vmatprep.subr.mxu0 0.0
    %379 = vmatpush1.msra.mxu0 0.0
    %380 = vmatprep.subr.mxu0 0.0
    %381 = vmatpush1.msra.mxu0 0.0
    %382 = vmatprep.subr.mxu0 0.0
    %383 = vmatpush1.msra.mxu0 0.0
    %384 = vmatprep.subr.mxu0 0.0
    %385 = vmatpush1.msra.mxu0 0.0
    %386 = vmatprep.subr.mxu0 0.0
    %387 = vmatpush1.msra.mxu0 0.0
    %388 = vmatprep.subr.mxu0 0.0
    %389 = vmatpush1.msra.mxu0 0.0
    %390 = vmatprep.subr.mxu0 0.0
    %391 = vmatpush1.msra.mxu0 0.0
    %392 = vmatprep.subr.mxu0 0.0
    %393 = vmatpush1.msra.mxu0 0.0
    %394 = vmatprep.subr.mxu0 0.0
    %395 = vmatpush1.msra.mxu0 0.0
    %396 = vmatprep.subr.mxu0 0.0
    %397 = vmatpush1.msra.mxu0 0.0
    %398 = vmatprep.subr.mxu0 0.0
    %399 = vmatpush1.msra.mxu0 0.0
    %400 = vmatprep.subr.mxu0 0.0
    %401 = vmatpush1.msra.mxu0 0.0
    %402 = vmatprep.subr.mxu0 0.0
    %403 = vmatpush1.msra.mxu0 0.0
    %404 = vmatprep.subr.mxu0 0.0
    %405 = vmatpush1.msra.mxu0 0.0
    %406 = vmatprep.subr.mxu0 0.0
    %407 = vmatpush1.msra.mxu0 0.0
    %408 = vmatprep.subr.mxu0 0.0
    %409 = vmatpush1.msra.mxu0 0.0
    %410 = vmatprep.subr.mxu0 0.0
    %411 = vmatpush1.msra.mxu0 0.0
    %412 = vmatprep.subr.mxu0 0.0
    %413 = vmatpush1.msra.mxu0 0.0
    %414 = vmatprep.subr.mxu0 0.0
    %415 = vmatpush1.msra.mxu0 0.0
    %416 = vmatprep.subr.mxu0 0.0
    %417 = vmatpush1.msra.mxu0 0.0
    %418 = vmatprep.subr.mxu0 0.0
    %419 = vmatpush1.msra.mxu0 0.0
    %420 = vmatprep.subr.mxu0 0.0
    %421 = vmatpush1.msra.mxu0 0.0
    %422 = vmatprep.subr.mxu0 0.0
    %423 = vmatpush1.msra.mxu0 0.0
    %424 = vmatprep.subr.mxu0 0.0
    %425 = vmatpush1.msra.mxu0 0.0
    %426 = vmatprep.mubr.f32.mxu0 0.0
    %427 = vmatmul.mubr.f32.gmra.mrb[0].mxu0 %v360
    %v428 = vpop.f32.mrb[0].mxu0
    %v429 = vadd.f32 0.0, %v428
    %v430 = vpop.f32.mrb[0].mxu0
    %431 = vdwg.mxu0
    %v432 = vadd.f32 %v345, %v429
    %v433 = vld [vmem:[%s5] sm:$0xff]
    %v434 = vld [vmem:[%s5 + $0x8] sm:$0xff]
    %v435 = vlaneseq
    %v436 = vshrl.u32 %v435, 7
    %v437 = vsub.s32 0, %v436
    %v438 = vrot.slane %v88, %v437
    %vm439 = vcmask 130048
    %v441 = vsel %vm439, %v432, 0
    %443 = vmatprep.subr.mxu0 0.0
    %444 = vmatpush1.msra.mxu0 %v433
    %445 = vmatprep.subr.mxu0 0.0
    %446 = vmatpush1.msra.mxu0 %v434
    %447 = vmatprep.subr.mxu0 0.0
    %448 = vmatpush1.msra.mxu0 0.0
    %449 = vmatprep.subr.mxu0 0.0
    %450 = vmatpush1.msra.mxu0 0.0
    %451 = vmatprep.subr.mxu0 0.0
    %452 = vmatpush1.msra.mxu0 0.0
    %453 = vmatprep.subr.mxu0 0.0
    %454 = vmatpush1.msra.mxu0 0.0
    %455 = vmatprep.subr.mxu0 0.0
    %456 = vmatpush1.msra.mxu0 0.0
    %457 = vmatprep.subr.mxu0 0.0
    %458 = vmatpush1.msra.mxu0 0.0
    %459 = vmatprep.subr.mxu0 0.0
    %460 = vmatpush1.msra.mxu0 0.0
    %461 = vmatprep.subr.mxu0 0.0
    %462 = vmatpush1.msra.mxu0 0.0
    %463 = vmatprep.subr.mxu0 0.0
    %464 = vmatpush1.msra.mxu0 0.0
    %465 = vmatprep.subr.mxu0 0.0
    %466 = vmatpush1.msra.mxu0 0.0
    %467 = vmatprep.subr.mxu0 0.0
    %468 = vmatpush1.msra.mxu0 0.0
    %469 = vmatprep.subr.mxu0 0.0
    %470 = vmatpush1.msra.mxu0 0.0
    %471 = vmatprep.subr.mxu0 0.0
    %472 = vmatpush1.msra.mxu0 0.0
    %473 = vmatprep.subr.mxu0 0.0
    %474 = vmatpush1.msra.mxu0 0.0
    %475 = vmatprep.subr.mxu0 0.0
    %476 = vmatpush1.msra.mxu0 0.0
    %477 = vmatprep.subr.mxu0 0.0
    %478 = vmatpush1.msra.mxu0 0.0
    %479 = vmatprep.subr.mxu0 0.0
    %480 = vmatpush1.msra.mxu0 0.0
    %481 = vmatprep.subr.mxu0 0.0
    %482 = vmatpush1.msra.mxu0 0.0
    %483 = vmatprep.subr.mxu0 0.0
    %484 = vmatpush1.msra.mxu0 0.0
    %485 = vmatprep.subr.mxu0 0.0
    %486 = vmatpush1.msra.mxu0 0.0
    %487 = vmatprep.subr.mxu0 0.0
    %488 = vmatpush1.msra.mxu0 0.0
    %489 = vmatprep.subr.mxu0 0.0
    %490 = vmatpush1.msra.mxu0 0.0
    %491 = vmatprep.subr.mxu0 0.0
    %492 = vmatpush1.msra.mxu0 0.0
    %493 = vmatprep.subr.mxu0 0.0
    %494 = vmatpush1.msra.mxu0 0.0
    %495 = vmatprep.subr.mxu0 0.0
    %496 = vmatpush1.msra.mxu0 0.0
    %497 = vmatprep.subr.mxu0 0.0
    %498 = vmatpush1.msra.mxu0 0.0
    %499 = vmatprep.subr.mxu0 0.0
    %500 = vmatpush1.msra.mxu0 0.0
    %501 = vmatprep.subr.mxu0 0.0
    %502 = vmatpush1.msra.mxu0 0.0
    %503 = vmatprep.subr.mxu0 0.0
    %504 = vmatpush1.msra.mxu0 0.0
    %505 = vmatprep.subr.mxu0 0.0
    %506 = vmatpush1.msra.mxu0 0.0
    %507 = vmatprep.mubr.f32.mxu0 0.0
    %508 = vmatmul.mubr.f32.gmra.mrb[0].mxu0 %v441
    %v509 = vpop.f32.mrb[0].mxu0
    %v510 = vadd.f32 %v438, %v509
    %v511 = vpop.f32.mrb[0].mxu0
    %512 = vdwg.mxu0
    %vm513 = vcmask 523264
    %v514 = vsel %vm513, %v510, -inf
    %515 = vmax.xlane.f32.xlu0 %v514
    %v516 = vpop.xlane.xlu0 %515
    %v517 = vsub.f32 %v510, %v516
    %v518 = vmul.f32 %v517, 1.442695
    %v519 = vpow.pop %v518
    %v520 = vsel %vm513, %v519, 0.0
    %521 = vadd.xlane.f32.xlu0 %v520
    %v522 = vpop.xlane.xlu0 %521
    %v523 = vrcp.pop %v522
    %v524 = vmul.f32 %v519, %v523
    %v525 = vlaneseq
    %v526 = vshrl.u32 %v525, 7
    %v527 = vsub.s32 0, %v526
    %v528 = vrot.slane %v87, %v527
    %v529 = vadd.f32 %v165, %v528
    %v530 = vmul.f32 %v529, %v524
    %531 = vst.msk [vmem:[#allocation11] sm:$0xff] %vm439, %v530
    %533 = vrot.lane.b32.xlu0 %v528, 112
    %v534 = vpop.permute.xlu0 %533
    %v536 = vadd.f32 %v255, %v534
    %538 = vrot.lane.b32.xlu0 %v524, 112
    %v539 = vpop.permute.xlu0 %538
    %v541 = vmul.f32 %v536, %v539
    %543 = vrot.lane.b32.xlu0 %v541, 16
    %v544 = vpop.permute.xlu0 %543
    %vm546 = vcmask 261248
    %547 = vst.msk [vmem:[#allocation11] sm:$0xff] %vm546, %v544
    %548 = vrot.lane.b32.xlu0 %v528, 96
    %v549 = vpop.permute.xlu0 %548
    %v551 = vadd.f32 %v342, %v549
    %552 = vrot.lane.b32.xlu0 %v524, 96
    %v553 = vpop.permute.xlu0 %552
    %v555 = vmul.f32 %v551, %v553
    %557 = vrot.lane.b32.xlu0 %v555, 32
    %v558 = vpop.permute.xlu0 %557
    %vm560 = vcmask 392448
    %561 = vst.msk [vmem:[#allocation11] sm:$0xff] %vm560, %v558
    %562 = vrot.lane.b32.xlu0 %v528, 80
    %v563 = vpop.permute.xlu0 %562
    %v565 = vadd.f32 %v429, %v563
    %566 = vrot.lane.b32.xlu0 %v524, 80
    %v567 = vpop.permute.xlu0 %566
    %v569 = vmul.f32 %v565, %v567
    %571 = vrot.lane.b32.xlu0 %v569, 48
    %v572 = vpop.permute.xlu0 %571
    %vm574 = vcmask 523648
    %575 = vst.msk [vmem:[#allocation11] sm:$0xff] %vm574, %v572
    // Predicated region
    $region50: #{tpu_custom_call.1} parent=1 // pred_check
      _
    $region51: #{tpu_custom_call.1} parent=1 // pred_check_branch
      %577 = sbr.rel (0) target = $region53
    $region52: #{tpu_custom_call.1} parent=1 // pred_region
      %s579 = ssub.s32 128, 128
      %580 = vsyncadd [#allocation4], %s579
      %s582 = sshll.u32 [#allocation11], 4
      %s583 = int_to_ptr.vmem [resolvable:$true] %s582
      %585 = dma.vmem_to_hbm [thread:$0]  %s583, 128, %s7, [#allocation4]
    $region53: #{tpu_custom_call.1} parent=1 // pred_fallthru
      _
    // Predicated region
    $region54: #{tpu_custom_call.1} parent=1 // pred_check
      _
    $region55: #{tpu_custom_call.1} parent=1 // pred_check_branch
      %587 = sbr.rel (0) target = $region57
    $region56: #{tpu_custom_call.1} parent=1 // pred_region
      %588 = dma.done [#allocation4], 128
    $region57: #{tpu_custom_call.1} parent=1 // pred_fallthru
      _
    %589 = vsyncpa [#allocation3], 1
    %590 = vsyncpa [#allocation6], 1
    %591 = vsyncpa [#allocation9], 1
    %592 = vsyncpa [#allocation4], 1

</llo_original>
